<compile_context>
chip_gen: v6e
topology: v6e:2x2x1
jax: 0.10.0
libtpu: 0.0.40
codegen_flags: <defaults>
</compile_context>

<pallas_src>
import functools
import re

import jax
import jax.numpy as jnp
from jax.experimental import pallas as pl
from jax.experimental.pallas import tpu as pltpu


# ---------------------------------------------------------------------------
# Helpers / hardware-aware configuration
# ---------------------------------------------------------------------------

def _round_up(n, m):
    return ((n + m - 1) // m) * m


def _tpu_generation():
    """Best-effort TPU generation detection (5, 6, 7, ...). None if unknown."""
    try:
        kind = jax.devices()[0].device_kind.lower()
    except Exception:
        return None
    m = re.search(r"(\d+)", kind)
    return int(m.group(1)) if m else None


def _hw_config():
    gen = _tpu_generation()
    if gen is not None and gen >= 7:
        # v7x: 64 MiB physical VMEM / TC, 2 TCs per chip, bf16 EUP, 2x256 MXU.
        return dict(gen=gen, vmem_cap=60 << 20, vmem_budget=46 << 20,
                    num_tc=2, feature_align=256, bf16_act=True)
    if gen == 6:
        # v6e: 128 MiB VMEM, 1 TC, 2x256x256 MXU, bf16 EUP/VPU.
        return dict(gen=gen, vmem_cap=120 << 20, vmem_budget=96 << 20,
                    num_tc=1, feature_align=256, bf16_act=True)
    if gen == 5:
        # v5e: 128 MiB VMEM, 1 TC, 4x128x128 MXU, no bf16 EUP -> f32 tanh.
        return dict(gen=gen, vmem_cap=120 << 20, vmem_budget=96 << 20,
                    num_tc=1, feature_align=128, bf16_act=False)
    # Unknown generation: conservative settings.
    return dict(gen=gen, vmem_cap=60 << 20, vmem_budget=44 << 20,
                num_tc=1, feature_align=128, bf16_act=False)


def _aligned_dim(n, align):
    # Lane-dense: never below 128; above 128 round to the MXU-native width.
    return 128 if n <= 128 else _round_up(n, align)


def _pad2(a, rows, cols, dtype):
    a = jnp.asarray(a)
    if a.shape == (rows, cols) and a.dtype == jnp.dtype(dtype):
        return a
    return jnp.zeros((rows, cols), dtype).at[:a.shape[0], :a.shape[1]].set(
        a.astype(dtype))


# ---------------------------------------------------------------------------
# Kernel
# ---------------------------------------------------------------------------

def _make_generator_kernel(act_dtype):
    """act_dtype: dtype used for the bias-add+tanh epilogues (bf16 on v6e/v7x
    bf16 path, f32 otherwise)."""

    def kernel(x_ref, w1_ref, b1_ref, w2_ref, b2_ref, w3_ref, b3_ref, o_ref):
        cdt = w1_ref.dtype                      # MXU operand dtype
        x = x_ref[...].astype(cdt)              # no-op if pre-cast in wrapper
        # Layer 1: Linear (f32 accumulation) + tanh.
        h1 = jnp.dot(x, w1_ref[...], preferred_element_type=jnp.float32)
        h1 = jnp.tanh((h1 + b1_ref[...]).astype(act_dtype))
        # Layer 2: Linear + tanh.
        h2 = jnp.dot(h1.astype(cdt), w2_ref[...],
                     preferred_element_type=jnp.float32)
        h2 = jnp.tanh((h2 + b2_ref[...]).astype(act_dtype))
        # Layer 3: Linear (no activation).
        out = jnp.dot(h2.astype(cdt), w3_ref[...],
                      preferred_element_type=jnp.float32) + b3_ref[...]
        o_ref[...] = out.astype(o_ref.dtype)

    return kernel


# ---------------------------------------------------------------------------
# Forward factory: pre-pack params once, return a jitted forward
# ---------------------------------------------------------------------------

def make_generator(w1, b1, w2, b2, w3, b3, *, compute_dtype=jnp.bfloat16,
                   out_dtype=None, block_batch=None):
    """Pre-pack (pad + cast) the Generator parameters once and return a jitted
    forward function x -> y.  Weight layout is (in, out), i.e. the transpose of
    PyTorch's nn.Linear.weight; biases may be (out,) or (1, out)."""
    hw = _hw_config()
    input_size, hidden_size = w1.shape
    output_size = w3.shape[1]
    assert w2.shape == (hidden_size, hidden_size)
    assert w3.shape[0] == hidden_size

    cdt = jnp.dtype(compute_dtype)
    cbytes = cdt.itemsize
    act_dtype = (jnp.bfloat16
                 if (cdt == jnp.dtype(jnp.bfloat16) and hw["bf16_act"])
                 else jnp.float32)
    act_bytes = jnp.dtype(act_dtype).itemsize

    falign = hw["feature_align"]
    ip = _aligned_dim(input_size, 128)
    hp = _aligned_dim(hidden_size, falign)
    op = _aligned_dim(output_size, falign)

    # ---- pre-packed parameters (done ONCE, outside the per-call path) ------
    b1 = jnp.reshape(jnp.asarray(b1), (1, -1))
    b2 = jnp.reshape(jnp.asarray(b2), (1, -1))
    b3 = jnp.reshape(jnp.asarray(b3), (1, -1))
    w1p = _pad2(w1, ip, hp, cdt)
    w2p = _pad2(w2, hp, hp, cdt)
    w3p = _pad2(w3, hp, op, cdt)
    b1p = _pad2(b1, 1, hp, jnp.float32)
    b2p = _pad2(b2, 1, hp, jnp.float32)
    b3p = _pad2(b3, 1, op, jnp.float32)
    packed = (w1p, b1p, w2p, b2p, w3p, b3p)

    # Pallas double-buffers every BlockSpec input by default -> count weights 2x.
    weight_bytes = 2 * ((ip * hp + hp * hp + hp * op) * cbytes
                        + (2 * hp + op) * 4)
    if weight_bytes > hw["vmem_budget"]:
        # TODO(synk): add a hidden-dim-tiled path (grid axis over hp blocks with
        # an f32 accumulator scratch) for hidden sizes whose resident weight set
        # exceeds VMEM (matters for hidden_size >= ~3-4k on v7x / v5e).
        raise ValueError(
            f"Resident weight set ({weight_bytes / 2**20:.1f} MiB, "
            f"double-buffered) exceeds the VMEM budget "
            f"({hw['vmem_budget'] / 2**20:.0f} MiB); hidden-dim tiling is not "
            "implemented.")

    if block_batch is None:
        block_batch = 1024 if cbytes <= 2 else 512

    kernel = _make_generator_kernel(act_dtype)

    @jax.jit
    def _fwd(x, w1p, b1p, w2p, b2p, w3p, b3p):
        batch = x.shape[0]
        assert x.shape[1] == input_size
        odt = jnp.dtype(x.dtype if out_dtype is None else out_dtype)
        obytes = odt.itemsize
        xbytes = max(jnp.dtype(x.dtype).itemsize, cbytes)

        # ---- batch tile sizing --------------------------------------------
        b8 = _round_up(batch, 8)
        bb = min(_round_up(block_batch, 8), b8)
        # v7x: ensure >= num_tc grid steps so the "parallel" axis actually
        # shards across both TensorCores (no-op on v5e/v6e).
        if hw["num_tc"] > 1 and b8 >= 8 * hw["num_tc"]:
            bb = min(bb, _round_up(-(-b8 // hw["num_tc"]), 8))

        def vmem_bytes(tile):
            io = 2 * (tile * ip * xbytes + tile * op * obytes)   # 2x-buffered x/out
            acts = 2 * tile * hp * act_bytes + tile * op * 4     # h1, h2, f32 out
            return weight_bytes + io + acts

        while bb > 8 and vmem_bytes(bb) > hw["vmem_budget"]:
            bb = max(8, _round_up(bb // 2, 8))

        bp = _round_up(batch, bb)
        grid = (bp // bb,)

        # Pad x only if actually ragged; fuse the compute-dtype cast into the
        # pad.  Otherwise pass x through untouched (cast happens in-kernel).
        if bp != batch or ip != input_size:
            xk = _pad2(x, bp, ip, cdt)
        else:
            xk = x

        in_specs = [
            pl.BlockSpec((bb, ip), lambda i: (i, 0)),   # x: batch-pipelined
            pl.BlockSpec((ip, hp), lambda i: (0, 0)),   # weights/biases resident
            pl.BlockSpec((1, hp), lambda i: (0, 0)),
            pl.BlockSpec((hp, hp), lambda i: (0, 0)),
            pl.BlockSpec((1, hp), lambda i: (0, 0)),
            pl.BlockSpec((hp, op), lambda i: (0, 0)),
            pl.BlockSpec((1, op), lambda i: (0, 0)),
        ]
        out_spec = pl.BlockSpec((bb, op), lambda i: (i, 0))

        cost = pl.CostEstimate(
            flops=2 * (bp * ip * hp + bp * hp * hp + bp * hp * op),
            transcendentals=2 * bp * hp,
            bytes_accessed=(bp * ip * xbytes
                            + (ip * hp + hp * hp + hp * op) * cbytes
                            + (2 * hp + op) * 4
                            + bp * op * obytes),
        )

        vmem_limit = min(hw["vmem_cap"],
                         max(int(vmem_bytes(bb) * 1.3) + (4 << 20), 32 << 20))

        out_padded = pl.pallas_call(
            kernel,
            out_shape=jax.ShapeDtypeStruct((bp, op), odt),
            grid=grid,
            in_specs=in_specs,
            out_specs=out_spec,
            compiler_params=pltpu.CompilerParams(
                dimension_semantics=("parallel",),
                vmem_limit_bytes=vmem_limit,
            ),
            cost_estimate=cost,
        )(xk, w1p, b1p, w2p, b2p, w3p, b3p)

        if bp != batch or op != output_size:
            return out_padded[:batch, :output_size]
        return out_padded

    def forward(x):
        return _fwd(x, *packed)

    return forward


# ---------------------------------------------------------------------------
# Reference & parameter init (for verification)
# ---------------------------------------------------------------------------

def init_generator_params(key, input_size, hidden_size, output_size,
                          dtype=jnp.float32):
    """Deterministic synthetic params. Weight layout is (in, out)
    (i.e. transpose of PyTorch's nn.Linear weight)."""
    ks = jax.random.split(key, 6)

    def linear(kw, kb, fan_in, fan_out):
        bound = 1.0 / jnp.sqrt(jnp.asarray(fan_in, dtype))
        w = jax.random.uniform(kw, (fan_in, fan_out), dtype,
                               minval=-bound, maxval=bound)
        b = jax.random.uniform(kb, (1, fan_out), dtype,
                               minval=-bound, maxval=bound)
        return w, b

    w1, b1 = linear(ks[0], ks[1], input_size, hidden_size)
    w2, b2 = linear(ks[2], ks[3], hidden_size, hidden_size)
    w3, b3 = linear(ks[4], ks[5], hidden_size, output_size)
    return w1, b1, w2, b2, w3, b3


def generator_ref(x, w1, b1, w2, b2, w3, b3):
    """Pure-JAX f32 reference."""
    h1 = jnp.tanh(x @ w1 + b1)
    h2 = jnp.tanh(h1 @ w2 + b2)
    return h2 @ w3 + b3


if __name__ == "__main__":
    key = jax.random.PRNGKey(0)

    # --- Case 1: small shapes consistent with the module's forward ----------
    batch, input_size, hidden_size, output_size = 8, 8, 32, 8
    k_x, k_p = jax.random.split(key)
    x = jax.random.normal(k_x, (batch, input_size), dtype=jnp.float32)
    params = init_generator_params(k_p, input_size, hidden_size, output_size)
    ref = generator_ref(x, *params)

    # Exact-precision path (f32 MXU operands): tight tolerance.
    gen_f32 = make_generator(*params, compute_dtype=jnp.float32)
    out_f32 = jax.block_until_ready(gen_f32(x))
    assert out_f32.shape == (batch, output_size)
    assert jnp.allclose(out_f32, ref, atol=1e-5, rtol=1e-5), (
        f"f32 max abs err {jnp.max(jnp.abs(out_f32 - ref))}")

    # Fast path (bf16 MXU operands, f32 accumulation, bf16 tanh on v6e/v7x).
    gen_bf16 = make_generator(*params, compute_dtype=jnp.bfloat16)
    out_bf16 = jax.block_until_ready(gen_bf16(x))
    assert out_bf16.shape == (batch, output_size)
    assert jnp.allclose(out_bf16, ref, atol=5e-2, rtol=5e-2), (
        f"bf16 max abs err {jnp.max(jnp.abs(out_bf16 - ref))}")

    # --- Case 2: ragged batch exercising the pipelined batch grid axis ------
    batch2, in2, hid2, out2 = 300, 16, 64, 24
    k_x2, k_p2 = jax.random.split(jax.random.PRNGKey(1))
    x2 = jax.random.normal(k_x2, (batch2, in2), dtype=jnp.float32)
    params2 = init_generator_params(k_p2, in2, hid2, out2)
    ref2 = generator_ref(x2, *params2)
    gen2 = make_generator(*params2, compute_dtype=jnp.float32, block_batch=128)
    out2_k = jax.block_until_ready(gen2(x2))          # grid >= 2 steps
    assert out2_k.shape == (batch2, out2)
    assert jnp.allclose(out2_k, ref2, atol=1e-5, rtol=1e-5), (
        f"case2 max abs err {jnp.max(jnp.abs(out2_k - ref2))}")

    # --- Case 3: already-aligned shapes (no wrapper pad / slice path) -------
    batch3, in3, hid3, out3 = 256, 128, 256, 128
    k_x3, k_p3 = jax.random.split(jax.random.PRNGKey(2))
    x3 = jax.random.normal(k_x3, (batch3, in3), dtype=jnp.float32)
    params3 = init_generator_params(k_p3, in3, hid3, out3)
    ref3 = generator_ref(x3, *params3)
    gen3 = make_generator(*params3, compute_dtype=jnp.bfloat16)
    out3_k = jax.block_until_ready(gen3(x3))
    assert out3_k.shape == (batch3, out3)
    assert jnp.allclose(out3_k, ref3, atol=8e-2, rtol=8e-2), (
        f"case3 max abs err {jnp.max(jnp.abs(out3_k - ref3))}")

    # bf16 output-dtype option (halves writeback traffic): must match the f32
    # output of the same compute path up to one bf16 rounding.
    gen3_bf16out = make_generator(*params3, compute_dtype=jnp.bfloat16,
                                  out_dtype=jnp.bfloat16)
    out3_b = jax.block_until_ready(gen3_bf16out(x3))
    assert out3_b.dtype == jnp.bfloat16 and out3_b.shape == (batch3, out3)
    assert jnp.allclose(out3_b.astype(jnp.float32), out3_k,
                        atol=2e-2, rtol=2e-2), "bf16 out_dtype mismatch"

    print("KERNEL_OK")
</pallas_src>

<mosaic_0001>
module attributes {stable_mosaic.version = 11 : i64} {
  func.func @kernel(%arg0: i32, %arg1: memref<8x128xf32, #tpu.memory_space<vmem>>, %arg2: memref<128x128xf32, #tpu.memory_space<vmem>>, %arg3: memref<1x128xf32, #tpu.memory_space<vmem>>, %arg4: memref<128x128xf32, #tpu.memory_space<vmem>>, %arg5: memref<1x128xf32, #tpu.memory_space<vmem>>, %arg6: memref<128x128xf32, #tpu.memory_space<vmem>>, %arg7: memref<1x128xf32, #tpu.memory_space<vmem>>, %arg8: memref<8x128xf32, #tpu.memory_space<vmem>>) attributes {dimension_semantics = [#tpu.dimension_semantics<parallel>], iteration_bounds = array<i64: 1>, scalar_prefetch = 0 : i64, scratch_operands = 0 : i64, tpu.core_type = #tpu.core_type<tc>, window_params = [{transform_indices = @transform_0, window_bounds = array<i64: 8, 128>}, {pipeline_mode = #tpu.pipeline_mode<synchronous>, transform_indices = @transform_1, window_bounds = array<i64: 128, 128>}, {pipeline_mode = #tpu.pipeline_mode<synchronous>, transform_indices = @transform_2, window_bounds = array<i64: 1, 128>}, {pipeline_mode = #tpu.pipeline_mode<synchronous>, transform_indices = @transform_3, window_bounds = array<i64: 128, 128>}, {pipeline_mode = #tpu.pipeline_mode<synchronous>, transform_indices = @transform_4, window_bounds = array<i64: 1, 128>}, {pipeline_mode = #tpu.pipeline_mode<synchronous>, transform_indices = @transform_5, window_bounds = array<i64: 128, 128>}, {pipeline_mode = #tpu.pipeline_mode<synchronous>, transform_indices = @transform_6, window_bounds = array<i64: 1, 128>}, {transform_indices = @transform_7, window_bounds = array<i64: 8, 128>}]} {
    %c0 = arith.constant 0 : index
    %c0_0 = arith.constant 0 : index
    %0 = vector.load %arg1[%c0, %c0_0] : memref<8x128xf32, #tpu.memory_space<vmem>>, vector<8x128xf32>
    %c0_1 = arith.constant 0 : index
    %c0_2 = arith.constant 0 : index
    %1 = vector.load %arg2[%c0_1, %c0_2] : memref<128x128xf32, #tpu.memory_space<vmem>>, vector<128x128xf32>
    %cst = arith.constant dense<0.000000e+00> : vector<8x128xf32>
    %2 = tpu.matmul %0, %1, %cst {dimension_numbers = #tpu.dot_dimension_numbers<[1], [0], [0], [1], [0, 0, 1, 1], [], []>} : vector<8x128xf32>, vector<128x128xf32>, vector<8x128xf32> -> vector<8x128xf32>
    %c0_3 = arith.constant 0 : index
    %c0_4 = arith.constant 0 : index
    %3 = vector.load %arg3[%c0_3, %c0_4] : memref<1x128xf32, #tpu.memory_space<vmem>>, vector<1x128xf32>
    %4 = vector.broadcast %3 : vector<1x128xf32> to vector<8x128xf32>
    %5 = arith.addf %2, %4 : vector<8x128xf32>
    %6 = math.tanh %5 : vector<8x128xf32>
    %c0_5 = arith.constant 0 : index
    %c0_6 = arith.constant 0 : index
    %7 = vector.load %arg4[%c0_5, %c0_6] : memref<128x128xf32, #tpu.memory_space<vmem>>, vector<128x128xf32>
    %cst_7 = arith.constant dense<0.000000e+00> : vector<8x128xf32>
    %8 = tpu.matmul %6, %7, %cst_7 {dimension_numbers = #tpu.dot_dimension_numbers<[1], [0], [0], [1], [0, 0, 1, 1], [], []>} : vector<8x128xf32>, vector<128x128xf32>, vector<8x128xf32> -> vector<8x128xf32>
    %c0_8 = arith.constant 0 : index
    %c0_9 = arith.constant 0 : index
    %9 = vector.load %arg5[%c0_8, %c0_9] : memref<1x128xf32, #tpu.memory_space<vmem>>, vector<1x128xf32>
    %10 = vector.broadcast %9 : vector<1x128xf32> to vector<8x128xf32>
    %11 = arith.addf %8, %10 : vector<8x128xf32>
    %12 = math.tanh %11 : vector<8x128xf32>
    %c0_10 = arith.constant 0 : index
    %c0_11 = arith.constant 0 : index
    %13 = vector.load %arg6[%c0_10, %c0_11] : memref<128x128xf32, #tpu.memory_space<vmem>>, vector<128x128xf32>
    %cst_12 = arith.constant dense<0.000000e+00> : vector<8x128xf32>
    %14 = tpu.matmul %12, %13, %cst_12 {dimension_numbers = #tpu.dot_dimension_numbers<[1], [0], [0], [1], [0, 0, 1, 1], [], []>} : vector<8x128xf32>, vector<128x128xf32>, vector<8x128xf32> -> vector<8x128xf32>
    %c0_13 = arith.constant 0 : index
    %c0_14 = arith.constant 0 : index
    %15 = vector.load %arg7[%c0_13, %c0_14] : memref<1x128xf32, #tpu.memory_space<vmem>>, vector<1x128xf32>
    %16 = vector.broadcast %15 : vector<1x128xf32> to vector<8x128xf32>
    %17 = arith.addf %14, %16 : vector<8x128xf32>
    %c0_15 = arith.constant 0 : index
    %c0_16 = arith.constant 0 : index
    %18 = vector.load %arg8[%c0_15, %c0_16] : memref<8x128xf32, #tpu.memory_space<vmem>>, vector<8x128xf32>
    tpu.vector_store %arg8[%c0_15, %c0_16], %17 {strides = array<i32>} : memref<8x128xf32, #tpu.memory_space<vmem>>, vector<8x128xf32>,
    return
  }
  func.func @transform_0(%arg0: i32) -> (i32, i32) {
    %c0_i32 = arith.constant 0 : i32
    %c0_i32_0 = arith.constant 0 : i32
    return %arg0, %c0_i32 : i32, i32
  }
  func.func @transform_1(%arg0: i32) -> (i32, i32) {
    %c0_i32 = arith.constant 0 : i32
    %c0_i32_0 = arith.constant 0 : i32
    %c0_i32_1 = arith.constant 0 : i32
    return %c0_i32, %c0_i32_0 : i32, i32
  }
  func.func @transform_2(%arg0: i32) -> (i32, i32) {
    %c0_i32 = arith.constant 0 : i32
    %c0_i32_0 = arith.constant 0 : i32
    %c0_i32_1 = arith.constant 0 : i32
    return %c0_i32, %c0_i32_0 : i32, i32
  }
  func.func @transform_3(%arg0: i32) -> (i32, i32) {
    %c0_i32 = arith.constant 0 : i32
    %c0_i32_0 = arith.constant 0 : i32
    %c0_i32_1 = arith.constant 0 : i32
    return %c0_i32, %c0_i32_0 : i32, i32
  }
  func.func @transform_4(%arg0: i32) -> (i32, i32) {
    %c0_i32 = arith.constant 0 : i32
    %c0_i32_0 = arith.constant 0 : i32
    %c0_i32_1 = arith.constant 0 : i32
    return %c0_i32, %c0_i32_0 : i32, i32
  }
  func.func @transform_5(%arg0: i32) -> (i32, i32) {
    %c0_i32 = arith.constant 0 : i32
    %c0_i32_0 = arith.constant 0 : i32
    %c0_i32_1 = arith.constant 0 : i32
    return %c0_i32, %c0_i32_0 : i32, i32
  }
  func.func @transform_6(%arg0: i32) -> (i32, i32) {
    %c0_i32 = arith.constant 0 : i32
    %c0_i32_0 = arith.constant 0 : i32
    %c0_i32_1 = arith.constant 0 : i32
    return %c0_i32, %c0_i32_0 : i32, i32
  }
  func.func @transform_7(%arg0: i32) -> (i32, i32) {
    %c0_i32 = arith.constant 0 : i32
    %c0_i32_0 = arith.constant 0 : i32
    return %arg0, %c0_i32 : i32, i32
  }
}

</mosaic_0001>

<llo_original>
// kernel: _fwd.1
$region0: #{_fwd.1}
  #allocation0 [shape = 'u32[]', space=smem, size = 0x4, offset = 0x4, fixed_abs, tag = 'smem constant byte address 0x4 - core index']
  #allocation1 [shape = 'u32[144,128]{1,0:T(1,128)}', space=vmem, size = 0x12000, scoped, tag = 'internal scratch']
  %s0 = inlined_call_operand.vmem [shape: f32[8,128], index: 0, kind: input, shape index: {}]
  %s1 = inlined_call_operand.hbm [shape: f32[128,128], index: 1, kind: input, shape index: {}]
  %s2 = inlined_call_operand.vmem [shape: f32[1,128], index: 2, kind: input, shape index: {}]
  %s3 = inlined_call_operand.hbm [shape: f32[128,128], index: 3, kind: input, shape index: {}]
  %s4 = inlined_call_operand.vmem [shape: f32[1,128], index: 4, kind: input, shape index: {}]
  %s5 = inlined_call_operand.hbm [shape: f32[128,128], index: 5, kind: input, shape index: {}]
  %s6 = inlined_call_operand.vmem [shape: f32[1,128], index: 6, kind: input, shape index: {}]
  %s7 = inlined_call_operand.hbm [shape: f32[8,128], index: 7, kind: output, shape index: {}]
  %s8 = sld [smem:[#allocation0]]
  $region50: #{_fwd.1} parent=0
    _
  %s10 = ssub.s32 1, %s8
  %s11 = scalar_select 0, %s10, %s8
  $region1: #{_fwd.1} parent=0
    #allocation2 [shape = 'u8[65536]{0}', space=vmem, size = 0x10000, scoped, tag = 'input window, operand 1, single buffered']
    #allocation3 [shape = 's32[1]{0}', space=sflag, size = 0x4, scoped, tag = 'scoped memory for _fwd.1']
    #allocation4 [shape = 's32[1]{0}', space=sflag, size = 0x4, scoped, tag = 'scoped memory for _fwd.1']
    #allocation5 [shape = 'u8[65536]{0}', space=vmem, size = 0x10000, scoped, tag = 'input window, operand 3, single buffered']
    #allocation6 [shape = 's32[1]{0}', space=sflag, size = 0x4, scoped, tag = 'scoped memory for _fwd.1']
    #allocation7 [shape = 'u8[65536]{0}', space=vmem, size = 0x10000, scoped, tag = 'input window, operand 5, single buffered']
    #allocation8 [shape = 'u8[4096]{0}', space=vmem, size = 0x1000, scoped, tag = 'output window, operand 0, single buffered']
    %12 = vsyncpa [#allocation3], 0
    %13 = vsyncpa [#allocation6], 0
    %14 = vsyncpa [#allocation4], 0
    // Predicated region
    $region2: #{_fwd.1} parent=1 // pred_check
      _
    $region3: #{_fwd.1} parent=1 // pred_check_branch
      %16 = sbr.rel (0) target = $region5
    $region4: #{_fwd.1} parent=1 // pred_region
      _
    $region5: #{_fwd.1} parent=1 // pred_fallthru
      _
    // Predicated region
    $region6: #{_fwd.1} parent=1 // pred_check
      _
    $region7: #{_fwd.1} parent=1 // pred_check_branch
      %18 = sbr.rel (0) target = $region9
    $region8: #{_fwd.1} parent=1 // pred_region
      %s20 = ssub.s32 2048, 2048
      %21 = vsyncadd [#allocation3], %s20
      %s22 = sshll.u32 [#allocation2], 4
      %s23 = int_to_ptr.vmem [resolvable:$true] %s22
      %28 = dma.hbm_to_vmem [thread:$0]  %s1, 2048, %s23, [#allocation3], 128, 128, 8
    $region9: #{_fwd.1} parent=1 // pred_fallthru
      _
    // Predicated region
    $region10: #{_fwd.1} parent=1 // pred_check
      _
    $region11: #{_fwd.1} parent=1 // pred_check_branch
      %30 = sbr.rel (0) target = $region13
    $region12: #{_fwd.1} parent=1 // pred_region
      _
    $region13: #{_fwd.1} parent=1 // pred_fallthru
      _
    // Predicated region
    $region14: #{_fwd.1} parent=1 // pred_check
      _
    $region15: #{_fwd.1} parent=1 // pred_check_branch
      %32 = sbr.rel (0) target = $region17
    $region16: #{_fwd.1} parent=1 // pred_region
      %s34 = ssub.s32 2048, 2048
      %35 = vsyncadd [#allocation6], %s34
      %s36 = sshll.u32 [#allocation5], 4
      %s37 = int_to_ptr.vmem [resolvable:$true] %s36
      %42 = dma.hbm_to_vmem [thread:$0]  %s3, 2048, %s37, [#allocation6], 128, 128, 8
    $region17: #{_fwd.1} parent=1 // pred_fallthru
      _
    // Predicated region
    $region18: #{_fwd.1} parent=1 // pred_check
      _
    $region19: #{_fwd.1} parent=1 // pred_check_branch
      %44 = sbr.rel (0) target = $region21
    $region20: #{_fwd.1} parent=1 // pred_region
      _
    $region21: #{_fwd.1} parent=1 // pred_fallthru
      _
    // Predicated region
    $region22: #{_fwd.1} parent=1 // pred_check
      _
    $region23: #{_fwd.1} parent=1 // pred_check_branch
      %46 = sbr.rel (0) target = $region25
    $region24: #{_fwd.1} parent=1 // pred_region
      %s48 = ssub.s32 2048, 2048
      %49 = vsyncadd [#allocation6], %s48
      %s50 = sshll.u32 [#allocation7], 4
      %s51 = int_to_ptr.vmem [resolvable:$true] %s50
      %56 = dma.hbm_to_vmem [thread:$0]  %s5, 2048, %s51, [#allocation6], 128, 128, 8
    $region25: #{_fwd.1} parent=1 // pred_fallthru
      _
    // Predicated region
    $region26: #{_fwd.1} parent=1 // pred_check
      _
    $region27: #{_fwd.1} parent=1 // pred_check_branch
      %58 = sbr.rel (0) target = $region29
    $region28: #{_fwd.1} parent=1 // pred_region
      _
    $region29: #{_fwd.1} parent=1 // pred_fallthru
      _
    // Predicated region
    $region30: #{_fwd.1} parent=1 // pred_check
      _
    $region31: #{_fwd.1} parent=1 // pred_check_branch
      %60 = sbr.rel (0) target = $region33
    $region32: #{_fwd.1} parent=1 // pred_region
      %61 = dma.done [#allocation3], 2048
    $region33: #{_fwd.1} parent=1 // pred_fallthru
      _
    // Predicated region
    $region34: #{_fwd.1} parent=1 // pred_check
      _
    $region35: #{_fwd.1} parent=1 // pred_check_branch
      %63 = sbr.rel (0) target = $region37
    $region36: #{_fwd.1} parent=1 // pred_region
      %64 = dma.done [#allocation6], 2048
    $region37: #{_fwd.1} parent=1 // pred_fallthru
      _
    // Predicated region
    $region38: #{_fwd.1} parent=1 // pred_check
      _
    $region39: #{_fwd.1} parent=1 // pred_check_branch
      %66 = sbr.rel (0) target = $region41
    $region40: #{_fwd.1} parent=1 // pred_region
      %67 = dma.done [#allocation6], 2048
    $region41: #{_fwd.1} parent=1 // pred_fallthru
      _
    %v68 = vld [vmem:[%s0] sm:$0xff]
    %v69 = vld [vmem:[#allocation2] sm:$0xff]
    %v70 = vld [vmem:[#allocation2 + $0x8] sm:$0xff]
    %v71 = vld [vmem:[#allocation2 + $0x10] sm:$0xff]
    %v72 = vld [vmem:[#allocation2 + $0x18] sm:$0xff]
    %v73 = vld [vmem:[#allocation2 + $0x20] sm:$0xff]
    %v74 = vld [vmem:[#allocation2 + $0x28] sm:$0xff]
    %v75 = vld [vmem:[#allocation2 + $0x30] sm:$0xff]
    %v76 = vld [vmem:[#allocation2 + $0x38] sm:$0xff]
    %v77 = vld [vmem:[#allocation2 + $0x40] sm:$0xff]
    %v78 = vld [vmem:[#allocation2 + $0x48] sm:$0xff]
    %v79 = vld [vmem:[#allocation2 + $0x50] sm:$0xff]
    %v80 = vld [vmem:[#allocation2 + $0x58] sm:$0xff]
    %v81 = vld [vmem:[#allocation2 + $0x60] sm:$0xff]
    %v82 = vld [vmem:[#allocation2 + $0x68] sm:$0xff]
    %v83 = vld [vmem:[#allocation2 + $0x70] sm:$0xff]
    %v84 = vld [vmem:[#allocation2 + $0x78] sm:$0xff]
    %v85 = vld [vmem:[%s2] sm:$0x1]
    %v87 = vlaneseq
    %v88 = vshrl.u32 %v87, 7
    %v89 = vsub.s32 0, %v88
    %v90 = vrot.slane %v85, %v89
    %92 = vmatprep.subr.mxu0 0.0
    %93 = vmatpush1.msra.mxu0 %v84
    %94 = vmatprep.subr.mxu0 0.0
    %95 = vmatpush1.msra.mxu0 %v83
    %96 = vmatprep.subr.mxu0 0.0
    %97 = vmatpush1.msra.mxu0 %v82
    %98 = vmatprep.subr.mxu0 0.0
    %99 = vmatpush1.msra.mxu0 %v81
    %100 = vmatprep.subr.mxu0 0.0
    %101 = vmatpush1.msra.mxu0 %v80
    %102 = vmatprep.subr.mxu0 0.0
    %103 = vmatpush1.msra.mxu0 %v79
    %104 = vmatprep.subr.mxu0 0.0
    %105 = vmatpush1.msra.mxu0 %v78
    %106 = vmatprep.subr.mxu0 0.0
    %107 = vmatpush1.msra.mxu0 %v77
    %108 = vmatprep.subr.mxu0 0.0
    %109 = vmatpush1.msra.mxu0 %v76
    %110 = vmatprep.subr.mxu0 0.0
    %111 = vmatpush1.msra.mxu0 %v75
    %112 = vmatprep.subr.mxu0 0.0
    %113 = vmatpush1.msra.mxu0 %v74
    %114 = vmatprep.subr.mxu0 0.0
    %115 = vmatpush1.msra.mxu0 %v73
    %116 = vmatprep.subr.mxu0 0.0
    %117 = vmatpush1.msra.mxu0 %v72
    %118 = vmatprep.subr.mxu0 0.0
    %119 = vmatpush1.msra.mxu0 %v71
    %120 = vmatprep.subr.mxu0 0.0
    %121 = vmatpush1.msra.mxu0 %v70
    %122 = vmatprep.subr.mxu0 0.0
    %123 = vmatpush1.msra.mxu0 %v69
    %124 = vmatprep.subr.mxu0 0.0
    %125 = vmatpush2.msra.mxu0 0.0
    %126 = vmatprep.subr.mxu0 0.0
    %127 = vmatpush2.msra.mxu0 0.0
    %128 = vmatprep.subr.mxu0 0.0
    %129 = vmatpush2.msra.mxu0 0.0
    %130 = vmatprep.subr.mxu0 0.0
    %131 = vmatpush2.msra.mxu0 0.0
    %132 = vmatprep.subr.mxu0 0.0
    %133 = vmatpush2.msra.mxu0 0.0
    %134 = vmatprep.subr.mxu0 0.0
    %135 = vmatpush2.msra.mxu0 0.0
    %136 = vmatprep.subr.mxu0 0.0
    %137 = vmatpush2.msra.mxu0 0.0
    %138 = vmatprep.subr.mxu0 0.0
    %139 = vmatpush2.msra.mxu0 0.0
    %140 = vmatprep.subr.mxu0 0.0
    %141 = vmatpush2.msra.mxu0 0.0
    %142 = vmatprep.subr.mxu0 0.0
    %143 = vmatpush2.msra.mxu0 0.0
    %144 = vmatprep.subr.mxu0 0.0
    %145 = vmatpush2.msra.mxu0 0.0
    %146 = vmatprep.subr.mxu0 0.0
    %147 = vmatpush2.msra.mxu0 0.0
    %148 = vmatprep.subr.mxu0 0.0
    %149 = vmatpush2.msra.mxu0 0.0
    %150 = vmatprep.subr.mxu0 0.0
    %151 = vmatpush2.msra.mxu0 0.0
    %152 = vmatprep.subr.mxu0 0.0
    %153 = vmatpush2.msra.mxu0 0.0
    %154 = vmatprep.subr.mxu0 0.0
    %155 = vmatpush2.msra.mxu0 0.0
    %156 = vmatprep.mubr.f32.mxu0 0.0
    %157 = vmatmul.mubr.f32.gmra.mxu0 %v68
    %v158 = vpop.f32.mrf.mxu0
    %v159 = vadd.f32 %v90, %v158
    %v160 = vpop.f32.mrf.mxu0
    %161 = vdwg.mxu0
    %v162 = vtanh.pop %v159
    %v163 = vld [vmem:[#allocation5] sm:$0xff]
    %v164 = vld [vmem:[#allocation5 + $0x8] sm:$0xff]
    %v165 = vld [vmem:[#allocation5 + $0x10] sm:$0xff]
    %v166 = vld [vmem:[#allocation5 + $0x18] sm:$0xff]
    %v167 = vld [vmem:[#allocation5 + $0x20] sm:$0xff]
    %v168 = vld [vmem:[#allocation5 + $0x28] sm:$0xff]
    %v169 = vld [vmem:[#allocation5 + $0x30] sm:$0xff]
    %v170 = vld [vmem:[#allocation5 + $0x38] sm:$0xff]
    %v171 = vld [vmem:[#allocation5 + $0x40] sm:$0xff]
    %v172 = vld [vmem:[#allocation5 + $0x48] sm:$0xff]
    %v173 = vld [vmem:[#allocation5 + $0x50] sm:$0xff]
    %v174 = vld [vmem:[#allocation5 + $0x58] sm:$0xff]
    %v175 = vld [vmem:[#allocation5 + $0x60] sm:$0xff]
    %v176 = vld [vmem:[#allocation5 + $0x68] sm:$0xff]
    %v177 = vld [vmem:[#allocation5 + $0x70] sm:$0xff]
    %v178 = vld [vmem:[#allocation5 + $0x78] sm:$0xff]
    %v179 = vld [vmem:[%s4] sm:$0x1]
    %v181 = vlaneseq
    %v182 = vshrl.u32 %v181, 7
    %v183 = vsub.s32 0, %v182
    %v184 = vrot.slane %v179, %v183
    %186 = vmatprep.subr.mxu0 0.0
    %187 = vmatpush1.msra.mxu0 %v178
    %188 = vmatprep.subr.mxu0 0.0
    %189 = vmatpush1.msra.mxu0 %v177
    %190 = vmatprep.subr.mxu0 0.0
    %191 = vmatpush1.msra.mxu0 %v176
    %192 = vmatprep.subr.mxu0 0.0
    %193 = vmatpush1.msra.mxu0 %v175
    %194 = vmatprep.subr.mxu0 0.0
    %195 = vmatpush1.msra.mxu0 %v174
    %196 = vmatprep.subr.mxu0 0.0
    %197 = vmatpush1.msra.mxu0 %v173
    %198 = vmatprep.subr.mxu0 0.0
    %199 = vmatpush1.msra.mxu0 %v172
    %200 = vmatprep.subr.mxu0 0.0
    %201 = vmatpush1.msra.mxu0 %v171
    %202 = vmatprep.subr.mxu0 0.0
    %203 = vmatpush1.msra.mxu0 %v170
    %204 = vmatprep.subr.mxu0 0.0
    %205 = vmatpush1.msra.mxu0 %v169
    %206 = vmatprep.subr.mxu0 0.0
    %207 = vmatpush1.msra.mxu0 %v168
    %208 = vmatprep.subr.mxu0 0.0
    %209 = vmatpush1.msra.mxu0 %v167
    %210 = vmatprep.subr.mxu0 0.0
    %211 = vmatpush1.msra.mxu0 %v166
    %212 = vmatprep.subr.mxu0 0.0
    %213 = vmatpush1.msra.mxu0 %v165
    %214 = vmatprep.subr.mxu0 0.0
    %215 = vmatpush1.msra.mxu0 %v164
    %216 = vmatprep.subr.mxu0 0.0
    %217 = vmatpush1.msra.mxu0 %v163
    %218 = vmatprep.subr.mxu0 0.0
    %219 = vmatpush2.msra.mxu0 0.0
    %220 = vmatprep.subr.mxu0 0.0
    %221 = vmatpush2.msra.mxu0 0.0
    %222 = vmatprep.subr.mxu0 0.0
    %223 = vmatpush2.msra.mxu0 0.0
    %224 = vmatprep.subr.mxu0 0.0
    %225 = vmatpush2.msra.mxu0 0.0
    %226 = vmatprep.subr.mxu0 0.0
    %227 = vmatpush2.msra.mxu0 0.0
    %228 = vmatprep.subr.mxu0 0.0
    %229 = vmatpush2.msra.mxu0 0.0
    %230 = vmatprep.subr.mxu0 0.0
    %231 = vmatpush2.msra.mxu0 0.0
    %232 = vmatprep.subr.mxu0 0.0
    %233 = vmatpush2.msra.mxu0 0.0
    %234 = vmatprep.subr.mxu0 0.0
    %235 = vmatpush2.msra.mxu0 0.0
    %236 = vmatprep.subr.mxu0 0.0
    %237 = vmatpush2.msra.mxu0 0.0
    %238 = vmatprep.subr.mxu0 0.0
    %239 = vmatpush2.msra.mxu0 0.0
    %240 = vmatprep.subr.mxu0 0.0
    %241 = vmatpush2.msra.mxu0 0.0
    %242 = vmatprep.subr.mxu0 0.0
    %243 = vmatpush2.msra.mxu0 0.0
    %244 = vmatprep.subr.mxu0 0.0
    %245 = vmatpush2.msra.mxu0 0.0
    %246 = vmatprep.subr.mxu0 0.0
    %247 = vmatpush2.msra.mxu0 0.0
    %248 = vmatprep.subr.mxu0 0.0
    %249 = vmatpush2.msra.mxu0 0.0
    %250 = vmatprep.mubr.f32.mxu0 0.0
    %251 = vmatmul.mubr.f32.gmra.mxu0 %v162
    %v252 = vpop.f32.mrf.mxu0
    %v253 = vadd.f32 %v184, %v252
    %v254 = vpop.f32.mrf.mxu0
    %255 = vdwg.mxu0
    %v256 = vtanh.pop %v253
    %v257 = vld [vmem:[#allocation7] sm:$0xff]
    %v258 = vld [vmem:[#allocation7 + $0x8] sm:$0xff]
    %v259 = vld [vmem:[#allocation7 + $0x10] sm:$0xff]
    %v260 = vld [vmem:[#allocation7 + $0x18] sm:$0xff]
    %v261 = vld [vmem:[#allocation7 + $0x20] sm:$0xff]
    %v262 = vld [vmem:[#allocation7 + $0x28] sm:$0xff]
    %v263 = vld [vmem:[#allocation7 + $0x30] sm:$0xff]
    %v264 = vld [vmem:[#allocation7 + $0x38] sm:$0xff]
    %v265 = vld [vmem:[#allocation7 + $0x40] sm:$0xff]
    %v266 = vld [vmem:[#allocation7 + $0x48] sm:$0xff]
    %v267 = vld [vmem:[#allocation7 + $0x50] sm:$0xff]
    %v268 = vld [vmem:[#allocation7 + $0x58] sm:$0xff]
    %v269 = vld [vmem:[#allocation7 + $0x60] sm:$0xff]
    %v270 = vld [vmem:[#allocation7 + $0x68] sm:$0xff]
    %v271 = vld [vmem:[#allocation7 + $0x70] sm:$0xff]
    %v272 = vld [vmem:[#allocation7 + $0x78] sm:$0xff]
    %v273 = vld [vmem:[%s6] sm:$0x1]
    %v275 = vlaneseq
    %v276 = vshrl.u32 %v275, 7
    %v277 = vsub.s32 0, %v276
    %v278 = vrot.slane %v273, %v277
    %280 = vmatprep.subr.mxu0 0.0
    %281 = vmatpush1.msra.mxu0 %v272
    %282 = vmatprep.subr.mxu0 0.0
    %283 = vmatpush1.msra.mxu0 %v271
    %284 = vmatprep.subr.mxu0 0.0
    %285 = vmatpush1.msra.mxu0 %v270
    %286 = vmatprep.subr.mxu0 0.0
    %287 = vmatpush1.msra.mxu0 %v269
    %288 = vmatprep.subr.mxu0 0.0
    %289 = vmatpush1.msra.mxu0 %v268
    %290 = vmatprep.subr.mxu0 0.0
    %291 = vmatpush1.msra.mxu0 %v267
    %292 = vmatprep.subr.mxu0 0.0
    %293 = vmatpush1.msra.mxu0 %v266
    %294 = vmatprep.subr.mxu0 0.0
    %295 = vmatpush1.msra.mxu0 %v265
    %296 = vmatprep.subr.mxu0 0.0
    %297 = vmatpush1.msra.mxu0 %v264
    %298 = vmatprep.subr.mxu0 0.0
    %299 = vmatpush1.msra.mxu0 %v263
    %300 = vmatprep.subr.mxu0 0.0
    %301 = vmatpush1.msra.mxu0 %v262
    %302 = vmatprep.subr.mxu0 0.0
    %303 = vmatpush1.msra.mxu0 %v261
    %304 = vmatprep.subr.mxu0 0.0
    %305 = vmatpush1.msra.mxu0 %v260
    %306 = vmatprep.subr.mxu0 0.0
    %307 = vmatpush1.msra.mxu0 %v259
    %308 = vmatprep.subr.mxu0 0.0
    %309 = vmatpush1.msra.mxu0 %v258
    %310 = vmatprep.subr.mxu0 0.0
    %311 = vmatpush1.msra.mxu0 %v257
    %312 = vmatprep.subr.mxu0 0.0
    %313 = vmatpush2.msra.mxu0 0.0
    %314 = vmatprep.subr.mxu0 0.0
    %315 = vmatpush2.msra.mxu0 0.0
    %316 = vmatprep.subr.mxu0 0.0
    %317 = vmatpush2.msra.mxu0 0.0
    %318 = vmatprep.subr.mxu0 0.0
    %319 = vmatpush2.msra.mxu0 0.0
    %320 = vmatprep.subr.mxu0 0.0
    %321 = vmatpush2.msra.mxu0 0.0
    %322 = vmatprep.subr.mxu0 0.0
    %323 = vmatpush2.msra.mxu0 0.0
    %324 = vmatprep.subr.mxu0 0.0
    %325 = vmatpush2.msra.mxu0 0.0
    %326 = vmatprep.subr.mxu0 0.0
    %327 = vmatpush2.msra.mxu0 0.0
    %328 = vmatprep.subr.mxu0 0.0
    %329 = vmatpush2.msra.mxu0 0.0
    %330 = vmatprep.subr.mxu0 0.0
    %331 = vmatpush2.msra.mxu0 0.0
    %332 = vmatprep.subr.mxu0 0.0
    %333 = vmatpush2.msra.mxu0 0.0
    %334 = vmatprep.subr.mxu0 0.0
    %335 = vmatpush2.msra.mxu0 0.0
    %336 = vmatprep.subr.mxu0 0.0
    %337 = vmatpush2.msra.mxu0 0.0
    %338 = vmatprep.subr.mxu0 0.0
    %339 = vmatpush2.msra.mxu0 0.0
    %340 = vmatprep.subr.mxu0 0.0
    %341 = vmatpush2.msra.mxu0 0.0
    %342 = vmatprep.subr.mxu0 0.0
    %343 = vmatpush2.msra.mxu0 0.0
    %344 = vmatprep.mubr.f32.mxu0 0.0
    %345 = vmatmul.mubr.f32.gmra.mxu0 %v256
    %v346 = vpop.f32.mrf.mxu0
    %v347 = vadd.f32 %v278, %v346
    %v348 = vpop.f32.mrf.mxu0
    %349 = vdwg.mxu0
    %350 = vst [vmem:[#allocation8] sm:$0xff] %v347
    // Predicated region
    $region42: #{_fwd.1} parent=1 // pred_check
      _
    $region43: #{_fwd.1} parent=1 // pred_check_branch
      %352 = sbr.rel (0) target = $region45
    $region44: #{_fwd.1} parent=1 // pred_region
      %s354 = ssub.s32 128, 128
      %355 = vsyncadd [#allocation4], %s354
      %s357 = sshll.u32 [#allocation8], 4
      %s358 = int_to_ptr.vmem [resolvable:$true] %s357
      %360 = dma.vmem_to_hbm [thread:$0]  %s358, 128, %s7, [#allocation4]
    $region45: #{_fwd.1} parent=1 // pred_fallthru
      _
    // Predicated region
    $region46: #{_fwd.1} parent=1 // pred_check
      _
    $region47: #{_fwd.1} parent=1 // pred_check_branch
      %362 = sbr.rel (0) target = $region49
    $region48: #{_fwd.1} parent=1 // pred_region
      %363 = dma.done [#allocation4], 128
    $region49: #{_fwd.1} parent=1 // pred_fallthru
      _
    %364 = vsyncpa [#allocation3], 1
    %365 = vsyncpa [#allocation6], 1
    %366 = vsyncpa [#allocation4], 1

</llo_original>
